<compile_context>
chip_gen: v6e
topology: v6e:2x2x1
jax: 0.10.0
libtpu: 0.0.40
codegen_flags: <defaults>
</compile_context>

<pallas_src>
import functools

import numpy as np

import jax
import jax.numpy as jnp
from jax import lax
from jax.experimental import pallas as pl
from jax.experimental.pallas import tpu as pltpu


def _fusion_kernel(x1_ref, x2_ref, w_ref, m_ref, o_ref, *, H, W):
    """One batch element: fused grouped 3x3 conv + instance norm + LeakyReLU."""
    HW = H * W
    x1 = x1_ref[0].astype(jnp.float32)            # (C1, HW), lane-dense
    x2 = x2_ref[0].astype(jnp.float32)            # (C1, HW)
    x = jnp.concatenate((x1, x2), axis=0)         # (Cin, HW)  modality concat in VMEM
    w = w_ref[...]                                # (Cout, 9*Cin), f32, block-diag dense

    # Build the im2col slab (9*Cin, HW): each 3x3 tap is a lane rotation of the
    # flattened image, with out-of-image positions zeroed by a precomputed mask
    # (this *is* the padding=1 of the conv).  Tap order t = (dy+1)*3 + (dx+1)
    # matches the column order of the expanded weight.
    cols = []
    t = 0
    for dy in (-1, 0, 1):
        for dx in (-1, 0, 1):
            s = dy * W + dx
            tap = x if s == 0 else pltpu.roll(x, (-s) % HW, 1)
            if (dy, dx) != (0, 0):
                tap = tap * m_ref[pl.ds(t, 1), :]      # (1, HW) border mask
            cols.append(tap)
            t += 1
    col = jnp.concatenate(cols, axis=0)           # (9*Cin, HW)

    # Single MXU contraction: (Cout, 9*Cin) @ (9*Cin, HW) -> (Cout, HW).
    acc = jnp.dot(w, col, preferred_element_type=jnp.float32)

    # InstanceNorm2d (affine=False, eps=1e-5, biased variance over H*W).
    mean = jnp.mean(acc, axis=1, keepdims=True)
    cen = acc - mean
    var = jnp.mean(cen * cen, axis=1, keepdims=True)
    y = cen * lax.rsqrt(var + 1e-5)

    # LeakyReLU(0.2)
    y = jnp.where(y >= 0, y, 0.2 * y)

    o_ref[0] = y.astype(o_ref.dtype)              # unmasked lane-dense (Cout, HW) store


def _expand_weight(weight, groups):
    """Grouped conv weight (Cout, Cin//G, 3, 3) -> dense (Cout, 9*Cin).

    Block-diagonal over groups; column order is tap-major ((ky, kx) row-major),
    channel-minor, matching the im2col slab built inside the kernel.
    """
    Cout, Cpg, KH, KW = weight.shape
    Cin = Cpg * groups
    Opg = Cout // groups
    dense = jnp.zeros((Cout, Cin, KH, KW), jnp.float32)
    for g in range(groups):
        dense = dense.at[g * Opg:(g + 1) * Opg, g * Cpg:(g + 1) * Cpg].set(
            weight[g * Opg:(g + 1) * Opg].astype(jnp.float32))
    # (Cout, Cin, KH, KW) -> (Cout, KH, KW, Cin) -> (Cout, 9*Cin)
    return dense.transpose(0, 2, 3, 1).reshape(Cout, KH * KW * Cin)


def _tap_masks(H, W):
    """(9, H*W) f32 validity masks per 3x3 tap (1 inside image, 0 at borders)."""
    hh = np.arange(H)[:, None]
    ww = np.arange(W)[None, :]
    rows = []
    for dy in (-1, 0, 1):
        for dx in (-1, 0, 1):
            valid = ((hh + dy >= 0) & (hh + dy < H) &
                     (ww + dx >= 0) & (ww + dx < W))
            rows.append(valid.reshape(-1).astype(np.float32))
    return jnp.asarray(np.stack(rows))


def fusion_block_v3(x1, x2, weight, bias, *, groups):
    """x1, x2: (N, C1, H, W) NCHW; weight: (Cout, (2*C1)//groups, 3, 3)."""
    N, C1, H, W = x1.shape
    HW = H * W
    Cout = weight.shape[0]
    Cin = 2 * C1

    # The Conv2d bias is mathematically cancelled by affine=False InstanceNorm
    # ((y + b) - mean(y + b) == y - mean(y), variance unchanged) -> dead compute.
    del bias

    wfull = _expand_weight(weight, groups)        # (Cout, 9*Cin) f32
    masks = _tap_masks(H, W)                      # (9, HW) f32

    # Free, contiguous reshapes to lane-dense layout (no HBM concat/pad passes).
    x1f = x1.reshape(N, C1, HW)
    x2f = x2.reshape(N, C1, HW)

    kernel = functools.partial(_fusion_kernel, H=H, W=W)

    out_flat = pl.pallas_call(
        kernel,
        out_shape=jax.ShapeDtypeStruct((N, Cout, HW), x1.dtype),
        grid_spec=pltpu.PrefetchScalarGridSpec(
            num_scalar_prefetch=0,
            grid=(N,),
            in_specs=[
                pl.BlockSpec((1, C1, HW), lambda n: (n, 0, 0)),
                pl.BlockSpec((1, C1, HW), lambda n: (n, 0, 0)),
                pl.BlockSpec((Cout, 9 * Cin), lambda n: (0, 0)),
                pl.BlockSpec((9, HW), lambda n: (0, 0)),
            ],
            out_specs=pl.BlockSpec((1, Cout, HW), lambda n: (n, 0, 0)),
        ),
        compiler_params=pltpu.CompilerParams(
            dimension_semantics=("parallel",)),   # 2 parallel steps -> both TCs on v7x
    )(x1f, x2f, wfull, masks)

    return out_flat.reshape(N, Cout, H, W)


def _reference(x1, x2, weight, bias, *, groups):
    """Pure-JAX reference (includes the bias, which cancels through the IN)."""
    x = jnp.concatenate((x1, x2), axis=1)
    y = lax.conv_general_dilated(
        x, weight, window_strides=(1, 1), padding=((1, 1), (1, 1)),
        dimension_numbers=("NCHW", "OIHW", "NCHW"),
        feature_group_count=groups,
    ) + bias.reshape(1, -1, 1, 1)
    mean = jnp.mean(y, axis=(2, 3), keepdims=True)
    var = jnp.mean((y - mean) ** 2, axis=(2, 3), keepdims=True)
    y = (y - mean) * lax.rsqrt(var + 1e-5)
    return jnp.where(y >= 0, y, 0.2 * y)


if __name__ == "__main__":
    # FusionBlock_v3(in_channels=4, out_channels=8, groups=2, num_mod=2)
    in_channels = 4
    out_channels = 8
    groups = 2
    num_mod = 2
    N, H, W = 2, 16, 16
    Cin_total = in_channels * num_mod

    key = jax.random.PRNGKey(0)
    k1, k2, kw, kb = jax.random.split(key, 4)
    x1 = jax.random.normal(k1, (N, in_channels, H, W), jnp.float32)
    x2 = jax.random.normal(k2, (N, in_channels, H, W), jnp.float32)

    # Deterministic synthetic parameters (Conv2d weight: (Cout, Cin/groups, 3, 3)).
    fan_in = (Cin_total // groups) * 3 * 3
    bound = 1.0 / (fan_in ** 0.5)
    weight = jax.random.uniform(
        kw, (out_channels, Cin_total // groups, 3, 3), jnp.float32,
        minval=-bound, maxval=bound)
    bias = jax.random.uniform(
        kb, (out_channels,), jnp.float32, minval=-bound, maxval=bound)

    out = fusion_block_v3(x1, x2, weight, bias, groups=groups)
    out = jax.block_until_ready(out)

    ref = _reference(x1, x2, weight, bias, groups=groups)
    assert out.shape == (N, out_channels, H, W)
    assert jnp.max(jnp.abs(out - ref)) < 1e-3, "mismatch vs reference"

    print("KERNEL_OK")
</pallas_src>

<mosaic_0001>
module attributes {stable_mosaic.version = 11 : i64} {
  func.func @_fusion_kernel(%arg0: i32, %arg1: memref<1x4x256xf32, #tpu.memory_space<vmem>>, %arg2: memref<1x4x256xf32, #tpu.memory_space<vmem>>, %arg3: memref<8x72xf32, #tpu.memory_space<vmem>>, %arg4: memref<9x256xf32, #tpu.memory_space<vmem>>, %arg5: memref<1x8x256xf32, #tpu.memory_space<vmem>>) attributes {dimension_semantics = [#tpu.dimension_semantics<parallel>], iteration_bounds = array<i64: 2>, scalar_prefetch = 0 : i64, scratch_operands = 0 : i64, tpu.core_type = #tpu.core_type<tc>, window_params = [{transform_indices = @transform_0, window_bounds = array<i64: 1, 4, 256>}, {transform_indices = @transform_1, window_bounds = array<i64: 1, 4, 256>}, {pipeline_mode = #tpu.pipeline_mode<synchronous>, transform_indices = @transform_2, window_bounds = array<i64: 8, 72>}, {pipeline_mode = #tpu.pipeline_mode<synchronous>, transform_indices = @transform_3, window_bounds = array<i64: 9, 256>}, {transform_indices = @transform_4, window_bounds = array<i64: 1, 8, 256>}]} {
    %c0 = arith.constant 0 : index
    %c0_0 = arith.constant 0 : index
    %c0_1 = arith.constant 0 : index
    %0 = vector.load %arg1[%c0, %c0_0, %c0_1] : memref<1x4x256xf32, #tpu.memory_space<vmem>>, vector<1x4x256xf32>
    %1 = vector.shape_cast %0 : vector<1x4x256xf32> to vector<4x256xf32>
    %c0_2 = arith.constant 0 : index
    %c0_3 = arith.constant 0 : index
    %c0_4 = arith.constant 0 : index
    %2 = vector.load %arg2[%c0_2, %c0_3, %c0_4] : memref<1x4x256xf32, #tpu.memory_space<vmem>>, vector<1x4x256xf32>
    %3 = vector.shape_cast %2 : vector<1x4x256xf32> to vector<4x256xf32>
    %4 = tpu.concatenate %1, %3 in 0 : vector<4x256xf32>, vector<4x256xf32> -> vector<8x256xf32>
    %c0_5 = arith.constant 0 : index
    %c0_6 = arith.constant 0 : index
    %5 = vector.load %arg3[%c0_5, %c0_6] : memref<8x72xf32, #tpu.memory_space<vmem>>, vector<8x72xf32>
    %c17_i32 = arith.constant 17 : i32
    %6 = tpu.dynamic_rotate %4 by %c17_i32 dim 1 : vector<8x256xf32>, i32 -> vector<8x256xf32>
    %c0_7 = arith.constant 0 : index
    %c0_8 = arith.constant 0 : index
    %7 = vector.load %arg4[%c0_7, %c0_8] : memref<9x256xf32, #tpu.memory_space<vmem>>, vector<1x256xf32>
    %8 = vector.broadcast %7 : vector<1x256xf32> to vector<8x256xf32>
    %9 = arith.mulf %6, %8 : vector<8x256xf32>
    %c16_i32 = arith.constant 16 : i32
    %10 = tpu.dynamic_rotate %4 by %c16_i32 dim 1 : vector<8x256xf32>, i32 -> vector<8x256xf32>
    %c1 = arith.constant 1 : index
    %c0_9 = arith.constant 0 : index
    %11 = vector.load %arg4[%c1, %c0_9] : memref<9x256xf32, #tpu.memory_space<vmem>>, vector<1x256xf32>
    %12 = vector.broadcast %11 : vector<1x256xf32> to vector<8x256xf32>
    %13 = arith.mulf %10, %12 : vector<8x256xf32>
    %c15_i32 = arith.constant 15 : i32
    %14 = tpu.dynamic_rotate %4 by %c15_i32 dim 1 : vector<8x256xf32>, i32 -> vector<8x256xf32>
    %c2 = arith.constant 2 : index
    %c0_10 = arith.constant 0 : index
    %15 = vector.load %arg4[%c2, %c0_10] : memref<9x256xf32, #tpu.memory_space<vmem>>, vector<1x256xf32>
    %16 = vector.broadcast %15 : vector<1x256xf32> to vector<8x256xf32>
    %17 = arith.mulf %14, %16 : vector<8x256xf32>
    %c1_i32 = arith.constant 1 : i32
    %18 = tpu.dynamic_rotate %4 by %c1_i32 dim 1 : vector<8x256xf32>, i32 -> vector<8x256xf32>
    %c3 = arith.constant 3 : index
    %c0_11 = arith.constant 0 : index
    %19 = vector.load %arg4[%c3, %c0_11] : memref<9x256xf32, #tpu.memory_space<vmem>>, vector<1x256xf32>
    %20 = vector.broadcast %19 : vector<1x256xf32> to vector<8x256xf32>
    %21 = arith.mulf %18, %20 : vector<8x256xf32>
    %c255_i32 = arith.constant 255 : i32
    %22 = tpu.dynamic_rotate %4 by %c255_i32 dim 1 : vector<8x256xf32>, i32 -> vector<8x256xf32>
    %c5 = arith.constant 5 : index
    %c0_12 = arith.constant 0 : index
    %23 = vector.load %arg4[%c5, %c0_12] : memref<9x256xf32, #tpu.memory_space<vmem>>, vector<1x256xf32>
    %24 = vector.broadcast %23 : vector<1x256xf32> to vector<8x256xf32>
    %25 = arith.mulf %22, %24 : vector<8x256xf32>
    %c241_i32 = arith.constant 241 : i32
    %26 = tpu.dynamic_rotate %4 by %c241_i32 dim 1 : vector<8x256xf32>, i32 -> vector<8x256xf32>
    %c6 = arith.constant 6 : index
    %c0_13 = arith.constant 0 : index
    %27 = vector.load %arg4[%c6, %c0_13] : memref<9x256xf32, #tpu.memory_space<vmem>>, vector<1x256xf32>
    %28 = vector.broadcast %27 : vector<1x256xf32> to vector<8x256xf32>
    %29 = arith.mulf %26, %28 : vector<8x256xf32>
    %c240_i32 = arith.constant 240 : i32
    %30 = tpu.dynamic_rotate %4 by %c240_i32 dim 1 : vector<8x256xf32>, i32 -> vector<8x256xf32>
    %c7 = arith.constant 7 : index
    %c0_14 = arith.constant 0 : index
    %31 = vector.load %arg4[%c7, %c0_14] : memref<9x256xf32, #tpu.memory_space<vmem>>, vector<1x256xf32>
    %32 = vector.broadcast %31 : vector<1x256xf32> to vector<8x256xf32>
    %33 = arith.mulf %30, %32 : vector<8x256xf32>
    %c239_i32 = arith.constant 239 : i32
    %34 = tpu.dynamic_rotate %4 by %c239_i32 dim 1 : vector<8x256xf32>, i32 -> vector<8x256xf32>
    %c8 = arith.constant 8 : index
    %c0_15 = arith.constant 0 : index
    %35 = vector.load %arg4[%c8, %c0_15] : memref<9x256xf32, #tpu.memory_space<vmem>>, vector<1x256xf32>
    %36 = vector.broadcast %35 : vector<1x256xf32> to vector<8x256xf32>
    %37 = arith.mulf %34, %36 : vector<8x256xf32>
    %38 = tpu.concatenate %9, %13, %17, %21, %4, %25, %29, %33, %37 in 0 : vector<8x256xf32>, vector<8x256xf32>, vector<8x256xf32>, vector<8x256xf32>, vector<8x256xf32>, vector<8x256xf32>, vector<8x256xf32>, vector<8x256xf32>, vector<8x256xf32> -> vector<72x256xf32>
    %cst = arith.constant dense<0.000000e+00> : vector<8x256xf32>
    %39 = tpu.matmul %5, %38, %cst {dimension_numbers = #tpu.dot_dimension_numbers<[1], [0], [0], [1], [0, 0, 1, 1], [], []>} : vector<8x72xf32>, vector<72x256xf32>, vector<8x256xf32> -> vector<8x256xf32>
    %cst_16 = arith.constant dense<0.000000e+00> : vector<8xf32>
    %40 = vector.multi_reduction <add>, %39, %cst_16 [1] : vector<8x256xf32> to vector<8xf32>
    %41 = vector.shape_cast %40 : vector<8xf32> to vector<8x1xf32>
    %cst_17 = arith.constant 2.560000e+02 : f32
    %42 = vector.broadcast %cst_17 : f32 to vector<8x1xf32>
    %43 = arith.divf %41, %42 : vector<8x1xf32>
    %44 = vector.broadcast %43 : vector<8x1xf32> to vector<8x256xf32>
    %45 = arith.subf %39, %44 : vector<8x256xf32>
    %46 = arith.mulf %45, %45 : vector<8x256xf32>
    %cst_18 = arith.constant dense<0.000000e+00> : vector<8xf32>
    %47 = vector.multi_reduction <add>, %46, %cst_18 [1] : vector<8x256xf32> to vector<8xf32>
    %48 = vector.shape_cast %47 : vector<8xf32> to vector<8x1xf32>
    %cst_19 = arith.constant 2.560000e+02 : f32
    %49 = vector.broadcast %cst_19 : f32 to vector<8x1xf32>
    %50 = arith.divf %48, %49 : vector<8x1xf32>
    %cst_20 = arith.constant 9.99999974E-6 : f32
    %51 = vector.broadcast %cst_20 : f32 to vector<8x1xf32>
    %52 = arith.addf %50, %51 : vector<8x1xf32>
    %53 = math.rsqrt %52 : vector<8x1xf32>
    %54 = vector.broadcast %53 : vector<8x1xf32> to vector<8x256xf32>
    %55 = arith.mulf %45, %54 : vector<8x256xf32>
    %cst_21 = arith.constant 0.000000e+00 : f32
    %56 = vector.broadcast %cst_21 : f32 to vector<8x256xf32>
    %57 = arith.cmpf oge, %55, %56 : vector<8x256xf32>
    %cst_22 = arith.constant 2.000000e-01 : f32
    %58 = vector.broadcast %cst_22 : f32 to vector<8x256xf32>
    %59 = arith.mulf %58, %55 : vector<8x256xf32>
    %60 = arith.select %57, %55, %59 : vector<8x256xi1>, vector<8x256xf32>
    %c0_23 = arith.constant 0 : index
    %c0_24 = arith.constant 0 : index
    %c0_25 = arith.constant 0 : index
    %61 = vector.load %arg5[%c0_23, %c0_24, %c0_25] : memref<1x8x256xf32, #tpu.memory_space<vmem>>, vector<1x8x256xf32>
    %62 = vector.shape_cast %61 : vector<1x8x256xf32> to vector<8x256xf32>
    %63 = vector.shape_cast %60 : vector<8x256xf32> to vector<1x8x256xf32>
    tpu.vector_store %arg5[%c0_23, %c0_24, %c0_25], %63 {strides = array<i32>} : memref<1x8x256xf32, #tpu.memory_space<vmem>>, vector<1x8x256xf32>,
    return
  }
  func.func @transform_0(%arg0: i32) -> (i32, i32, i32) {
    %c0_i32 = arith.constant 0 : i32
    %c0_i32_0 = arith.constant 0 : i32
    %c0_i32_1 = arith.constant 0 : i32
    return %arg0, %c0_i32, %c0_i32_0 : i32, i32, i32
  }
  func.func @transform_1(%arg0: i32) -> (i32, i32, i32) {
    %c0_i32 = arith.constant 0 : i32
    %c0_i32_0 = arith.constant 0 : i32
    %c0_i32_1 = arith.constant 0 : i32
    return %arg0, %c0_i32, %c0_i32_0 : i32, i32, i32
  }
  func.func @transform_2(%arg0: i32) -> (i32, i32) {
    %c0_i32 = arith.constant 0 : i32
    %c0_i32_0 = arith.constant 0 : i32
    %c0_i32_1 = arith.constant 0 : i32
    return %c0_i32, %c0_i32_0 : i32, i32
  }
  func.func @transform_3(%arg0: i32) -> (i32, i32) {
    %c0_i32 = arith.constant 0 : i32
    %c0_i32_0 = arith.constant 0 : i32
    %c0_i32_1 = arith.constant 0 : i32
    return %c0_i32, %c0_i32_0 : i32, i32
  }
  func.func @transform_4(%arg0: i32) -> (i32, i32, i32) {
    %c0_i32 = arith.constant 0 : i32
    %c0_i32_0 = arith.constant 0 : i32
    %c0_i32_1 = arith.constant 0 : i32
    return %arg0, %c0_i32, %c0_i32_0 : i32, i32, i32
  }
}

</mosaic_0001>

<llo_original>
// kernel: tpu_custom_call.1
$region0: #{tpu_custom_call.1}
  #allocation0 [shape = 'u32[]', space=smem, size = 0x4, offset = 0x4, fixed_abs, tag = 'smem constant byte address 0x4 - core index']
  #allocation1 [shape = 'u32[144,128]{1,0:T(1,128)}', space=vmem, size = 0x12000, scoped, tag = 'internal scratch']
  %s0 = inlined_call_operand.hbm [shape: f32[2,4,256], index: 0, kind: input, shape index: {}]
  %s1 = inlined_call_operand.hbm [shape: f32[2,4,256], index: 1, kind: input, shape index: {}]
  %s2 = inlined_call_operand.hbm [shape: f32[8,72], index: 2, kind: input, shape index: {}]
  %s3 = inlined_call_operand.hbm [shape: f32[9,256], index: 3, kind: input, shape index: {}]
  %s4 = inlined_call_operand.hbm [shape: f32[2,8,256], index: 4, kind: output, shape index: {}]
  %s5 = sld [smem:[#allocation0]]
  $region65: #{tpu_custom_call.1} parent=0
    _
  %s7 = ssub.s32 1, %s5
  %s8 = scalar_select 0, %s7, %s5
  $region1: #{tpu_custom_call.1} parent=0
    #allocation2 [shape = 'u8[8192]{0}', space=vmem, size = 0x2000, scoped, tag = 'input window, operand 0']
    #allocation3 [shape = 's32[2]{0}', space=sflag, size = 0x8, scoped, tag = 'scoped memory for tpu_custom_call.1']
    #allocation4 [shape = 's32[2]{0}', space=sflag, size = 0x8, scoped, tag = 'scoped memory for tpu_custom_call.1']
    #allocation5 [shape = 'u8[8192]{0}', space=vmem, size = 0x2000, scoped, tag = 'input window, operand 1']
    #allocation6 [shape = 's32[2]{0}', space=sflag, size = 0x8, scoped, tag = 'scoped memory for tpu_custom_call.1']
    #allocation7 [shape = 'u8[4096]{0}', space=vmem, size = 0x1000, scoped, tag = 'input window, operand 2, single buffered']
    #allocation8 [shape = 'u8[16384]{0}', space=vmem, size = 0x4000, scoped, tag = 'input window, operand 3, single buffered']
    #allocation9 [shape = 's32[1]{0}', space=sflag, size = 0x4, scoped, tag = 'scoped memory for tpu_custom_call.1']
    #allocation10 [shape = 'u8[16384]{0}', space=vmem, size = 0x4000, scoped, tag = 'output window, operand 0']
    %9 = vsyncpa [#allocation3], 0
    %s10 = scalar_lea.sflag [#allocation3], 1
    %11 = vsyncpa %s10, 0
    %12 = vsyncpa [#allocation6], 0
    %s13 = scalar_lea.sflag [#allocation6], 1
    %14 = vsyncpa %s13, 0
    %15 = vsyncpa [#allocation9], 0
    %16 = vsyncpa [#allocation4], 0
    %s17 = scalar_lea.sflag [#allocation4], 1
    %18 = vsyncpa %s17, 0
    loop: start=0, step=1, limit=4
    $region2: #{tpu_custom_call.1} parent=1 // loop_pre_header
      _
    $region3: #{tpu_custom_call.1} parent=1 // loop_header
      %s20 = sphi 0, %s24
      %p21 = scmp.ge.s32.totalorder %s20, 4
      %s30 = sphi 0, %s32
      %s33 = sphi 0, %s30
      %s34 = sphi 0, %s33
      %s50 = sphi 0, %s34
      %s56 = sphi 0, %s58
      %s59 = sphi 0, %s56
      %s60 = sphi 0, %s59
      %s76 = sphi 0, %s60
      %s80 = sphi 0, %s80
      %s82 = sphi 0, %s80
      %s83 = sphi 0, %s82
      %s97 = sphi 0, %s83
      %s101 = sphi 0, %s101
      %s103 = sphi 0, %s101
      %s104 = sphi 0, %s103
      %s118 = sphi 0, %s104
      %s124 = sphi 0, %s126
      %s127 = sphi 0, %s124
      %s128 = sphi 0, %s127
      %s144 = sphi 0, %s128
    $region4: #{tpu_custom_call.1} parent=1 // loop_header_branch
      %23 = sbr.rel (%p21) target = $region8
    $region5: #{tpu_custom_call.1} parent=1 // loop_body
      %s25 = ssub.s32 %s20, 1
      %s26 = ssub.s32 %s20, 2
      %s27 = sadd.s32 %s20, 1
      %s28 = ssub.s32 %s20, %s27
      %p29 = scmp.eq.s32.totalorder %s28, 0
      %s31 = sadd.s32 %s30, 1
      %s32 = scalar_select %p29, %s30, %s31
      %p35 = pneg %p29
      %p36 = scmp.eq.s32.totalorder %s20, 1
      %p37 = por %p35, %p36
      %p38 = scmp.ne.s32.totalorder %s30, %s33
      %p39 = scmp.eq.s32.totalorder %s20, 0
      %p40 = por %p38, %p39
      %p41 = scmp.ne.s32.totalorder %s30, %s33
      %p42 = scmp.eq.s32.totalorder %s25, 1
      %p43 = por %p41, %p42
      %p44 = scmp.ne.s32.totalorder %s33, %s34
      %p45 = scmp.eq.s32.totalorder %s25, 0
      %p46 = por %p44, %p45
      %p47 = scmp.ne.s32.totalorder %s33, %s34
      %p48 = scmp.eq.s32.totalorder %s26, 1
      %p49 = por %p47, %p48
      %p51 = scmp.ne.s32.totalorder %s34, %s50
      %p52 = scmp.eq.s32.totalorder %s26, 0
      %p53 = por %p51, %p52
      %s54 = ssub.s32 %s20, %s27
      %p55 = scmp.eq.s32.totalorder %s54, 0
      %s57 = sadd.s32 %s56, 1
      %s58 = scalar_select %p55, %s56, %s57
      %p61 = pneg %p55
      %p62 = scmp.eq.s32.totalorder %s20, 1
      %p63 = por %p61, %p62
      %p64 = scmp.ne.s32.totalorder %s56, %s59
      %p65 = scmp.eq.s32.totalorder %s20, 0
      %p66 = por %p64, %p65
      %p67 = scmp.ne.s32.totalorder %s56, %s59
      %p68 = scmp.eq.s32.totalorder %s25, 1
      %p69 = por %p67, %p68
      %p70 = scmp.ne.s32.totalorder %s59, %s60
      %p71 = scmp.eq.s32.totalorder %s25, 0
      %p72 = por %p70, %p71
      %p73 = scmp.ne.s32.totalorder %s59, %s60
      %p74 = scmp.eq.s32.totalorder %s26, 1
      %p75 = por %p73, %p74
      %p77 = scmp.ne.s32.totalorder %s60, %s76
      %p78 = scmp.eq.s32.totalorder %s26, 0
      %p79 = por %p77, %p78
      %s81 = sadd.s32 %s80, 1
      %p84 = scmp.eq.s32.totalorder %s20, 1
      %p85 = scmp.ne.s32.totalorder %s80, %s82
      %p86 = scmp.eq.s32.totalorder %s20, 0
      %p87 = por %p85, %p86
      %p88 = scmp.ne.s32.totalorder %s80, %s82
      %p89 = scmp.eq.s32.totalorder %s25, 1
      %p90 = por %p88, %p89
      %p91 = scmp.ne.s32.totalorder %s82, %s83
      %p92 = scmp.eq.s32.totalorder %s25, 0
      %p93 = por %p91, %p92
      %p94 = scmp.ne.s32.totalorder %s82, %s83
      %p95 = scmp.eq.s32.totalorder %s26, 1
      %p96 = por %p94, %p95
      %p98 = scmp.ne.s32.totalorder %s83, %s97
      %p99 = scmp.eq.s32.totalorder %s26, 0
      %p100 = por %p98, %p99
      %s102 = sadd.s32 %s101, 1
      %p105 = scmp.eq.s32.totalorder %s20, 1
      %p106 = scmp.ne.s32.totalorder %s101, %s103
      %p107 = scmp.eq.s32.totalorder %s20, 0
      %p108 = por %p106, %p107
      %p109 = scmp.ne.s32.totalorder %s101, %s103
      %p110 = scmp.eq.s32.totalorder %s25, 1
      %p111 = por %p109, %p110
      %p112 = scmp.ne.s32.totalorder %s103, %s104
      %p113 = scmp.eq.s32.totalorder %s25, 0
      %p114 = por %p112, %p113
      %p115 = scmp.ne.s32.totalorder %s103, %s104
      %p116 = scmp.eq.s32.totalorder %s26, 1
      %p117 = por %p115, %p116
      %p119 = scmp.ne.s32.totalorder %s104, %s118
      %p120 = scmp.eq.s32.totalorder %s26, 0
      %p121 = por %p119, %p120
      %s122 = ssub.s32 %s20, %s27
      %p123 = scmp.eq.s32.totalorder %s122, 0
      %s125 = sadd.s32 %s124, 1
      %s126 = scalar_select %p123, %s124, %s125
      %p129 = pneg %p123
      %p130 = scmp.eq.s32.totalorder %s20, 1
      %p131 = por %p129, %p130
      %p132 = scmp.ne.s32.totalorder %s124, %s127
      %p133 = scmp.eq.s32.totalorder %s20, 0
      %p134 = por %p132, %p133
      %p135 = scmp.ne.s32.totalorder %s124, %s127
      %p136 = scmp.eq.s32.totalorder %s25, 1
      %p137 = por %p135, %p136
      %p138 = scmp.ne.s32.totalorder %s127, %s128
      %p139 = scmp.eq.s32.totalorder %s25, 0
      %p140 = por %p138, %p139
      %p141 = scmp.ne.s32.totalorder %s127, %s128
      %p142 = scmp.eq.s32.totalorder %s26, 1
      %p143 = por %p141, %p142
      %p145 = scmp.ne.s32.totalorder %s128, %s144
      %p146 = scmp.eq.s32.totalorder %s26, 0
      %p147 = por %p145, %p146
      %p148 = scmp.le.s32.totalorder 1, %s20
      %p149 = scmp.lt.s32.totalorder %s20, 3
      %p150 = pnand %p148, %p149
      %p151 = pneg %p150
      // Predicated region
      $region9: #{tpu_custom_call.1} parent=5 // pred_check
        _
      $region10: #{tpu_custom_call.1} parent=5 // pred_check_branch
        %153 = sbr.rel (%p150) target = $region12
      $region11: #{tpu_custom_call.1} parent=5 // pred_region
        %s154 = ssub.s32 %s20, 1
        // Predicated region
        $region13: #{tpu_custom_call.1} parent=11 // pred_check
          %p155 = pneg %p93
        $region14: #{tpu_custom_call.1} parent=11 // pred_check_branch
          %157 = sbr.rel (%p155) target = $region16
        $region15: #{tpu_custom_call.1} parent=11 // pred_region
          %s159 = ssub.s32 128, 128
          %160 = vsyncadd [#allocation6], %s159
          %s162 = sshll.u32 [#allocation7], 4
          %s163 = int_to_ptr.vmem [resolvable:$true] %s162
          %165 = dma.hbm_to_vmem [thread:$0]  %s2, 128, %s163, [#allocation6]
        $region16: #{tpu_custom_call.1} parent=11 // pred_fallthru
          _
        // Predicated region
        $region17: #{tpu_custom_call.1} parent=11 // pred_check
          %p166 = pneg %p114
        $region18: #{tpu_custom_call.1} parent=11 // pred_check_branch
          %168 = sbr.rel (%p166) target = $region20
        $region19: #{tpu_custom_call.1} parent=11 // pred_region
          %s170 = ssub.s32 512, 512
          %171 = vsyncadd [#allocation9], %s170
          %s172 = sshll.u32 [#allocation8], 4
          %s173 = int_to_ptr.vmem [resolvable:$true] %s172
          %178 = dma.hbm_to_vmem [thread:$0]  %s3, 512, %s173, [#allocation9], 256, 256, 16
        $region20: #{tpu_custom_call.1} parent=11 // pred_fallthru
          _
      $region12: #{tpu_custom_call.1} parent=5 // pred_fallthru
        _
      %p179 = scmp.lt.s32.totalorder %s20, 2
      // Predicated region
      $region21: #{tpu_custom_call.1} parent=5 // pred_check
        %p180 = pneg %p179
      $region22: #{tpu_custom_call.1} parent=5 // pred_check_branch
        %182 = sbr.rel (%p180) target = $region24
      $region23: #{tpu_custom_call.1} parent=5 // pred_region
        // Predicated region
        $region25: #{tpu_custom_call.1} parent=23 // pred_check
          %p183 = pneg %p40
        $region26: #{tpu_custom_call.1} parent=23 // pred_check_branch
          %185 = sbr.rel (%p183) target = $region28
        $region27: #{tpu_custom_call.1} parent=23 // pred_region
          %s186 = sand.u32 %s30, 1
          %s187 = scalar_lea.sflag [#allocation3], %s186
          %s188 = sand.u32 %s30, 1
          %s189 = smul.addr %s188, 8
          %s190 = scalar_lea.vmem [#allocation2], %s189
          %s192 = ssub.s32 128, 128
          %193 = vsyncadd %s187, %s192
          %s194 = smul.addr %s20, 2
          %s195 = smul.addr %s194, 64
          %s196 = scalar_lea.hbm %s0, %s195
          %s198 = sshll.u32 %s190, 4
          %s199 = int_to_ptr.vmem [resolvable:$true] %s198
          %201 = dma.hbm_to_vmem [thread:$0]  %s196, 128, %s199, %s187
        $region28: #{tpu_custom_call.1} parent=23 // pred_fallthru
          _
        // Predicated region
        $region29: #{tpu_custom_call.1} parent=23 // pred_check
          %p202 = pneg %p66
        $region30: #{tpu_custom_call.1} parent=23 // pred_check_branch
          %204 = sbr.rel (%p202) target = $region32
        $region31: #{tpu_custom_call.1} parent=23 // pred_region
          %s205 = sand.u32 %s20, 1
          %s206 = scalar_lea.sflag [#allocation6], %s205
          %s207 = sand.u32 %s56, 1
          %s208 = smul.addr %s207, 8
          %s209 = scalar_lea.vmem [#allocation5], %s208
          %s211 = ssub.s32 128, 128
          %212 = vsyncadd %s206, %s211
          %s213 = smul.addr %s20, 2
          %s214 = smul.addr %s213, 64
          %s215 = scalar_lea.hbm %s1, %s214
          %s217 = sshll.u32 %s209, 4
          %s218 = int_to_ptr.vmem [resolvable:$true] %s217
          %220 = dma.hbm_to_vmem [thread:$0]  %s215, 128, %s218, %s206
        $region32: #{tpu_custom_call.1} parent=23 // pred_fallthru
          _
      $region24: #{tpu_custom_call.1} parent=5 // pred_fallthru
        _
      %p221 = scmp.le.s32.totalorder 1, %s20
      %p222 = scmp.lt.s32.totalorder %s20, 3
      %p223 = pnand %p221, %p222
      %p224 = pneg %p223
      // Predicated region
      $region33: #{tpu_custom_call.1} parent=5 // pred_check
        _
      $region34: #{tpu_custom_call.1} parent=5 // pred_check_branch
        %226 = sbr.rel (%p223) target = $region36
      $region35: #{tpu_custom_call.1} parent=5 // pred_region
        %s227 = ssub.s32 %s20, 1
        %s228 = sand.u32 %s33, 1
        %s229 = scalar_lea.sflag [#allocation3], %s228
        %s230 = sand.u32 %s33, 1
        %s231 = smul.addr %s230, 8
        %s232 = scalar_lea.vmem [#allocation2], %s231
        // Predicated region
        $region37: #{tpu_custom_call.1} parent=35 // pred_check
          %p233 = pneg %p46
        $region38: #{tpu_custom_call.1} parent=35 // pred_check_branch
          %235 = sbr.rel (%p233) target = $region40
        $region39: #{tpu_custom_call.1} parent=35 // pred_region
          %236 = dma.done %s229, 128
        $region40: #{tpu_custom_call.1} parent=35 // pred_fallthru
          _
        %s237 = sand.u32 %s25, 1
        %s238 = scalar_lea.sflag [#allocation6], %s237
        %s239 = sand.u32 %s59, 1
        %s240 = smul.addr %s239, 8
        %s241 = scalar_lea.vmem [#allocation5], %s240
        // Predicated region
        $region41: #{tpu_custom_call.1} parent=35 // pred_check
          %p242 = pneg %p72
        $region42: #{tpu_custom_call.1} parent=35 // pred_check_branch
          %244 = sbr.rel (%p242) target = $region44
        $region43: #{tpu_custom_call.1} parent=35 // pred_region
          %245 = dma.done %s238, 128
        $region44: #{tpu_custom_call.1} parent=35 // pred_fallthru
          _
        // Predicated region
        $region45: #{tpu_custom_call.1} parent=35 // pred_check
          %p246 = pneg %p93
        $region46: #{tpu_custom_call.1} parent=35 // pred_check_branch
          %248 = sbr.rel (%p246) target = $region48
        $region47: #{tpu_custom_call.1} parent=35 // pred_region
          %249 = dma.done [#allocation6], 128
        $region48: #{tpu_custom_call.1} parent=35 // pred_fallthru
          _
        // Predicated region
        $region49: #{tpu_custom_call.1} parent=35 // pred_check
          %p250 = pneg %p114
        $region50: #{tpu_custom_call.1} parent=35 // pred_check_branch
          %252 = sbr.rel (%p250) target = $region52
        $region51: #{tpu_custom_call.1} parent=35 // pred_region
          %253 = dma.done [#allocation9], 512
        $region52: #{tpu_custom_call.1} parent=35 // pred_fallthru
          _
        %s254 = sand.u32 %s33, 1
        %s255 = scalar_lea.sflag [#allocation3], %s254
        %s256 = sand.u32 %s33, 1
        %s257 = smul.addr %s256, 8
        %s258 = scalar_lea.vmem [#allocation2], %s257
        %p259 = pneg %p46
        %p260 = pneg %p43
        %s261 = sand.u32 %s25, 1
        %s262 = scalar_lea.sflag [#allocation6], %s261
        %s263 = sand.u32 %s59, 1
        %s264 = smul.addr %s263, 8
        %s265 = scalar_lea.vmem [#allocation5], %s264
        %p266 = pneg %p72
        %p267 = pneg %p69
        %p268 = pneg %p93
        %p269 = pneg %p90
        %p270 = pneg %p114
        %p271 = pneg %p111
        %p272 = pneg %p140
        %p273 = pneg %p137
        %s274 = sand.u32 %s127, 1
        %s275 = scalar_lea.sflag [#allocation4], %s274
        %s276 = sand.u32 %s127, 1
        %s277 = smul.addr %s276, 16
        %s278 = scalar_lea.vmem [#allocation10], %s277
        %v279 = vld [vmem:[%s232] sm:$0xff]
        %v280 = vld [vmem:[%s241] sm:$0xff]
        %v282 = vcombine.high %v279, %v279
        %v285 = vcombine.low %v280, %v280
        %vm287 = vcmask 1043456
        %v288 = vsel %vm287, %v279, %v285
        %v289 = vsel %vm287, %v282, %v280
        %v290 = vld [vmem:[#allocation7] sm:$0xff]
        %291 = vrot.lane.b32.xlu0 %v288, 17
        %v292 = vpop.permute.xlu0 %291
        %293 = vrot.lane.b32.xlu0 %v289, 17
        %v294 = vpop.permute.xlu0 %293
        %v295 = vlaneseq
        %v296 = vand.u32 %v295, 127
        %vm297 = vcmp.lt.s32.totalorder %v296, 17
        %v298 = vsel %vm297, %v292, %v294
        %v299 = vsel %vm297, %v294, %v292
        %v300 = vld [vmem:[#allocation8] ss:$8 sm:$0x3]
        %v302 = vlaneseq
        %v303 = vshrl.u32 %v302, 7
        %v304 = vsub.s32 0, %v303
        %v305 = vrot.slane %v300, %v304
        %v306 = vlaneseq
        %v307 = vshrl.u32 %v306, 7
        %v308 = vsub.s32 1, %v307
        %v309 = vrot.slane %v300, %v308
        %v312 = vmul.f32 %v299, %v305
        %v313 = vmul.f32 %v298, %v309
        %314 = vrot.lane.b32.xlu0 %v288, 16
        %v315 = vpop.permute.xlu0 %314
        %316 = vrot.lane.b32.xlu0 %v289, 16
        %v317 = vpop.permute.xlu0 %316
        %vm318 = vcmp.lt.s32.totalorder %v296, 16
        %v319 = vsel %vm318, %v315, %v317
        %v320 = vsel %vm318, %v317, %v315
        %s321 = scalar_lea.vmem [#allocation8], 1
        %v322 = vld [vmem:[%s321] ss:$8 sm:$0x3]
        %v324 = vlaneseq
        %v325 = vshrl.u32 %v324, 7
        %v326 = vsub.s32 0, %v325
        %v327 = vrot.slane %v322, %v326
        %v328 = vlaneseq
        %v329 = vshrl.u32 %v328, 7
        %v330 = vsub.s32 1, %v329
        %v331 = vrot.slane %v322, %v330
        %v334 = vmul.f32 %v320, %v327
        %v335 = vmul.f32 %v319, %v331
        %336 = vrot.lane.b32.xlu0 %v288, 15
        %v337 = vpop.permute.xlu0 %336
        %338 = vrot.lane.b32.xlu0 %v289, 15
        %v339 = vpop.permute.xlu0 %338
        %vm340 = vcmp.lt.s32.totalorder %v296, 15
        %v341 = vsel %vm340, %v337, %v339
        %v342 = vsel %vm340, %v339, %v337
        %s343 = scalar_lea.vmem [#allocation8], 2
        %v344 = vld [vmem:[%s343] ss:$8 sm:$0x3]
        %v346 = vlaneseq
        %v347 = vshrl.u32 %v346, 7
        %v348 = vsub.s32 0, %v347
        %v349 = vrot.slane %v344, %v348
        %v350 = vlaneseq
        %v351 = vshrl.u32 %v350, 7
        %v352 = vsub.s32 1, %v351
        %v353 = vrot.slane %v344, %v352
        %v356 = vmul.f32 %v342, %v349
        %v357 = vmul.f32 %v341, %v353
        %358 = vrot.lane.b32.xlu0 %v288, 1
        %v359 = vpop.permute.xlu0 %358
        %360 = vrot.lane.b32.xlu0 %v289, 1
        %v361 = vpop.permute.xlu0 %360
        %vm362 = vcmp.lt.s32.totalorder %v296, 1
        %v363 = vsel %vm362, %v359, %v361
        %v364 = vsel %vm362, %v361, %v359
        %s365 = scalar_lea.vmem [#allocation8], 3
        %v366 = vld [vmem:[%s365] ss:$8 sm:$0x3]
        %v368 = vlaneseq
        %v369 = vshrl.u32 %v368, 7
        %v370 = vsub.s32 0, %v369
        %v371 = vrot.slane %v366, %v370
        %v372 = vlaneseq
        %v373 = vshrl.u32 %v372, 7
        %v374 = vsub.s32 1, %v373
        %v375 = vrot.slane %v366, %v374
        %v378 = vmul.f32 %v364, %v371
        %v379 = vmul.f32 %v363, %v375
        %380 = vrot.lane.b32.xlu0 %v288, 127
        %v381 = vpop.permute.xlu0 %380
        %382 = vrot.lane.b32.xlu0 %v289, 127
        %v383 = vpop.permute.xlu0 %382
        %vm384 = vcmp.lt.s32.totalorder %v296, 127
        %v385 = vsel %vm384, %v381, %v383
        %v386 = vsel %vm384, %v383, %v381
        %s387 = scalar_lea.vmem [#allocation8], 5
        %v388 = vld [vmem:[%s387] ss:$8 sm:$0x3]
        %v390 = vlaneseq
        %v391 = vshrl.u32 %v390, 7
        %v392 = vsub.s32 0, %v391
        %v393 = vrot.slane %v388, %v392
        %v394 = vlaneseq
        %v395 = vshrl.u32 %v394, 7
        %v396 = vsub.s32 1, %v395
        %v397 = vrot.slane %v388, %v396
        %v400 = vmul.f32 %v385, %v393
        %v401 = vmul.f32 %v386, %v397
        %402 = vrot.lane.b32.xlu0 %v288, 113
        %v403 = vpop.permute.xlu0 %402
        %404 = vrot.lane.b32.xlu0 %v289, 113
        %v405 = vpop.permute.xlu0 %404
        %vm406 = vcmp.lt.s32.totalorder %v296, 113
        %v407 = vsel %vm406, %v403, %v405
        %v408 = vsel %vm406, %v405, %v403
        %s409 = scalar_lea.vmem [#allocation8], 6
        %v410 = vld [vmem:[%s409] ss:$8 sm:$0x3]
        %v412 = vlaneseq
        %v413 = vshrl.u32 %v412, 7
        %v414 = vsub.s32 0, %v413
        %v415 = vrot.slane %v410, %v414
        %v416 = vlaneseq
        %v417 = vshrl.u32 %v416, 7
        %v418 = vsub.s32 1, %v417
        %v419 = vrot.slane %v410, %v418
        %v422 = vmul.f32 %v407, %v415
        %v423 = vmul.f32 %v408, %v419
        %424 = vrot.lane.b32.xlu0 %v288, 112
        %v425 = vpop.permute.xlu0 %424
        %426 = vrot.lane.b32.xlu0 %v289, 112
        %v427 = vpop.permute.xlu0 %426
        %vm428 = vcmp.lt.s32.totalorder %v296, 112
        %v429 = vsel %vm428, %v425, %v427
        %v430 = vsel %vm428, %v427, %v425
        %s431 = scalar_lea.vmem [#allocation8], 7
        %v432 = vld [vmem:[%s431] ss:$8 sm:$0x3]
        %v434 = vlaneseq
        %v435 = vshrl.u32 %v434, 7
        %v436 = vsub.s32 0, %v435
        %v437 = vrot.slane %v432, %v436
        %v438 = vlaneseq
        %v439 = vshrl.u32 %v438, 7
        %v440 = vsub.s32 1, %v439
        %v441 = vrot.slane %v432, %v440
        %v444 = vmul.f32 %v429, %v437
        %v445 = vmul.f32 %v430, %v441
        %446 = vrot.lane.b32.xlu0 %v288, 111
        %v447 = vpop.permute.xlu0 %446
        %448 = vrot.lane.b32.xlu0 %v289, 111
        %v449 = vpop.permute.xlu0 %448
        %vm450 = vcmp.lt.s32.totalorder %v296, 111
        %v451 = vsel %vm450, %v447, %v449
        %v452 = vsel %vm450, %v449, %v447
        %s453 = scalar_lea.vmem [#allocation8], 16
        %v454 = vld [vmem:[%s453] ss:$8 sm:$0x3]
        %v456 = vlaneseq
        %v457 = vshrl.u32 %v456, 7
        %v458 = vsub.s32 0, %v457
        %v459 = vrot.slane %v454, %v458
        %v460 = vlaneseq
        %v461 = vshrl.u32 %v460, 7
        %v462 = vsub.s32 1, %v461
        %v463 = vrot.slane %v454, %v462
        %v466 = vmul.f32 %v451, %v459
        %v467 = vmul.f32 %v452, %v463
        %vm468 = vcmask 588800
        %v470 = vsel %vm468, %v290, 0
        %472 = vmatprep.subr.mxu0 0.0
        %473 = vmatpush1.msra.mxu0 0.0
        %474 = vmatprep.subr.mxu0 0.0
        %475 = vmatpush1.msra.mxu0 0.0
        %476 = vmatprep.subr.mxu0 0.0
        %477 = vmatpush1.msra.mxu0 0.0
        %478 = vmatprep.subr.mxu0 0.0
        %479 = vmatpush1.msra.mxu0 0.0
        %480 = vmatprep.subr.mxu0 0.0
        %481 = vmatpush1.msra.mxu0 0.0
        %482 = vmatprep.subr.mxu0 0.0
        %483 = vmatpush1.msra.mxu0 0.0
        %484 = vmatprep.subr.mxu0 0.0
        %485 = vmatpush1.msra.mxu0 0.0
        %486 = vmatprep.subr.mxu0 %v467
        %487 = vmatpush1.msra.mxu0 %v466
        %488 = vmatprep.subr.mxu0 %v445
        %489 = vmatpush1.msra.mxu0 %v444
        %490 = vmatprep.subr.mxu0 %v423
        %491 = vmatpush1.msra.mxu0 %v422
        %492 = vmatprep.subr.mxu0 %v401
        %493 = vmatpush1.msra.mxu0 %v400
        %494 = vmatprep.subr.mxu0 %v289
        %495 = vmatpush1.msra.mxu0 %v288
        %496 = vmatprep.subr.mxu0 %v379
        %497 = vmatpush1.msra.mxu0 %v378
        %498 = vmatprep.subr.mxu0 %v357
        %499 = vmatpush1.msra.mxu0 %v356
        %500 = vmatprep.subr.mxu0 %v335
        %501 = vmatpush1.msra.mxu0 %v334
        %502 = vmatprep.subr.mxu0 %v313
        %503 = vmatpush1.msra.mxu0 %v312
        %504 = vmatprep.subr.mxu0 0.0
        %505 = vmatpush2.msra.mxu0 0.0
        %506 = vmatprep.subr.mxu0 0.0
        %507 = vmatpush2.msra.mxu0 0.0
        %508 = vmatprep.subr.mxu0 0.0
        %509 = vmatpush2.msra.mxu0 0.0
        %510 = vmatprep.subr.mxu0 0.0
        %511 = vmatpush2.msra.mxu0 0.0
        %512 = vmatprep.subr.mxu0 0.0
        %513 = vmatpush2.msra.mxu0 0.0
        %514 = vmatprep.subr.mxu0 0.0
        %515 = vmatpush2.msra.mxu0 0.0
        %516 = vmatprep.subr.mxu0 0.0
        %517 = vmatpush2.msra.mxu0 0.0
        %518 = vmatprep.subr.mxu0 0.0
        %519 = vmatpush2.msra.mxu0 0.0
        %520 = vmatprep.subr.mxu0 0.0
        %521 = vmatpush2.msra.mxu0 0.0
        %522 = vmatprep.subr.mxu0 0.0
        %523 = vmatpush2.msra.mxu0 0.0
        %524 = vmatprep.subr.mxu0 0.0
        %525 = vmatpush2.msra.mxu0 0.0
        %526 = vmatprep.subr.mxu0 0.0
        %527 = vmatpush2.msra.mxu0 0.0
        %528 = vmatprep.subr.mxu0 0.0
        %529 = vmatpush2.msra.mxu0 0.0
        %530 = vmatprep.subr.mxu0 0.0
        %531 = vmatpush2.msra.mxu0 0.0
        %532 = vmatprep.subr.mxu0 0.0
        %533 = vmatpush2.msra.mxu0 0.0
        %534 = vmatprep.subr.mxu0 0.0
        %535 = vmatpush2.msra.mxu0 0.0
        %536 = vmatprep.mubr.f32.mxu0 0.0
        %537 = vmatmul.mubr.f32.gmra.mxu0 %v470
        %v538 = vpop.f32.mrf.mxu0
        %v539 = vadd.f32 0.0, %v538
        %v540 = vpop.f32.mrf.mxu0
        %v541 = vadd.f32 0.0, %v540
        %542 = vdwg.mxu0
        %v543 = vadd.f32 %v539, %v541
        %544 = vadd.xlane.f32.xlu0 %v543
        %v545 = vpop.xlane.xlu0 %544
        %v546 = vrcp.pop 256.0
        %v547 = vmul.f32 %v545, %v546
        %v548 = vsub.f32 %v539, %v547
        %v549 = vsub.f32 %v541, %v547
        %v550 = vmul.f32 %v548, %v548
        %v551 = vmul.f32 %v549, %v549
        %v552 = vadd.f32 %v550, %v551
        %553 = vadd.xlane.f32.xlu0 %v552
        %v554 = vpop.xlane.xlu0 %553
        %v555 = vmul.f32 %v554, %v546
        %v556 = vadd.f32 %v555, 1e-05
        %v557 = vrsqrt.pop %v556
        %v558 = vmul.f32 %v548, %v557
        %v559 = vmul.f32 %v549, %v557
        %vm560 = vcmp.ge.f32.partialorder %v558, 0.0
        %vm561 = vcmp.ge.f32.partialorder %v559, 0.0
        %v562 = vmul.f32 %v558, 0.2
        %v563 = vmul.f32 %v559, 0.2
        %v564 = vsel %vm560, %v558, %v562
        %v565 = vsel %vm561, %v559, %v563
        %566 = vst [vmem:[%s278] sm:$0xff] %v564
        %567 = vst [vmem:[%s278 + $0x8] sm:$0xff] %v565
        %s568 = sand.u32 %s127, 1
        %s569 = scalar_lea.sflag [#allocation4], %s568
        %s570 = sand.u32 %s127, 1
        %s571 = smul.addr %s570, 16
        %s572 = scalar_lea.vmem [#allocation10], %s571
        // Predicated region
        $region53: #{tpu_custom_call.1} parent=35 // pred_check
          %p573 = pneg %p137
        $region54: #{tpu_custom_call.1} parent=35 // pred_check_branch
          %575 = sbr.rel (%p573) target = $region56
        $region55: #{tpu_custom_call.1} parent=35 // pred_region
          %s577 = ssub.s32 256, 256
          %578 = vsyncadd %s569, %s577
          %s579 = smul.addr %s25, 2
          %s580 = smul.addr %s579, 128
          %s581 = scalar_lea.hbm %s4, %s580
          %s583 = sshll.u32 %s572, 4
          %s584 = int_to_ptr.vmem [resolvable:$true] %s583
          %586 = dma.vmem_to_hbm [thread:$0]  %s584, 256, %s581, %s569
        $region56: #{tpu_custom_call.1} parent=35 // pred_fallthru
          _
      $region36: #{tpu_custom_call.1} parent=5 // pred_fallthru
        _
      %p587 = scmp.le.s32.totalorder 2, %s20
      // Predicated region
      $region57: #{tpu_custom_call.1} parent=5 // pred_check
        %p588 = pneg %p587
      $region58: #{tpu_custom_call.1} parent=5 // pred_check_branch
        %590 = sbr.rel (%p588) target = $region60
      $region59: #{tpu_custom_call.1} parent=5 // pred_region
        %s591 = ssub.s32 %s20, 2
        // Predicated region
        $region61: #{tpu_custom_call.1} parent=59 // pred_check
          %p592 = pneg %p143
        $region62: #{tpu_custom_call.1} parent=59 // pred_check_branch
          %594 = sbr.rel (%p592) target = $region64
        $region63: #{tpu_custom_call.1} parent=59 // pred_region
          %s595 = sand.u32 %s128, 1
          %s596 = scalar_lea.sflag [#allocation4], %s595
          %s597 = sand.u32 %s128, 1
          %s598 = smul.addr %s597, 16
          %s599 = scalar_lea.vmem [#allocation10], %s598
          %600 = dma.done %s596, 256
        $region64: #{tpu_custom_call.1} parent=59 // pred_fallthru
          _
      $region60: #{tpu_custom_call.1} parent=5 // pred_fallthru
        _
    $region6: #{tpu_custom_call.1} parent=1 // loop_footer
      %s24 = sadd.s32 1, %s20
    $region7: #{tpu_custom_call.1} parent=1 // loop_footer_branch
      %19 = sbr.rel target = $region3
    $region8: #{tpu_custom_call.1} parent=1 // loop_exit
      _
    %601 = vsyncpa [#allocation3], 1
    %s602 = scalar_lea.sflag [#allocation3], 1
    %603 = vsyncpa %s602, 1
    %604 = vsyncpa [#allocation6], 1
    %s605 = scalar_lea.sflag [#allocation6], 1
    %606 = vsyncpa %s605, 1
    %607 = vsyncpa [#allocation9], 1
    %608 = vsyncpa [#allocation4], 1
    %s609 = scalar_lea.sflag [#allocation4], 1
    %610 = vsyncpa %s609, 1

</llo_original>
